<compile_context>
chip_gen: v7x
topology: tpu7x:2x2x1
jax: 0.10.0
libtpu: 0.0.40
codegen_flags: <defaults>
</compile_context>

<pallas_src>
import math
import functools

import numpy as np
import jax
import jax.numpy as jnp
from jax.experimental import pallas as pl
from jax.experimental.pallas import tpu as pltpu


# ----------------------------------------------------------------------------
# Fused kernel: per-batch MHA + residual + 'layer' normalization
# ----------------------------------------------------------------------------
def _mha_sublayer_kernel(x_ref, wqkv_ref, wo_ref, o_ref, *,
                         n_heads, key_dim, norm_factor, eps):
    # x_ref    : (1, N, E)   current batch row
    # wqkv_ref : (E, 3*H*K)  [Wq_all_heads | Wk_all_heads | Wv_all_heads]
    # wo_ref   : (H*K, E)
    N = x_ref.shape[1]
    E = x_ref.shape[2]
    H, K = n_heads, key_dim
    HK = H * K

    x = x_ref[0]                                                      # (N, E)

    # Fused Q/K/V projection for all heads: one lane-dense MXU matmul.
    qkv = jnp.dot(x, wqkv_ref[...], preferred_element_type=jnp.float32)  # (N, 3*H*K)
    q = qkv[:, 0 * HK:1 * HK]                                         # (N, H*K)
    k = qkv[:, 1 * HK:2 * HK]
    v = qkv[:, 2 * HK:3 * HK]

    # Per-head attention; H is small and static -> Python-unrolled, 2-D MXU dots.
    head_outs = []
    for h in range(H):
        qh = q[:, h * K:(h + 1) * K]                                  # (N, K)
        kh = k[:, h * K:(h + 1) * K]                                  # (N, K)
        vh = v[:, h * K:(h + 1) * K]                                  # (N, K)

        # norm_factor * qh @ kh^T  (contract on K, no explicit transpose)
        s = norm_factor * jax.lax.dot_general(
            qh, kh, (((1,), (1,)), ((), ())),
            preferred_element_type=jnp.float32)                       # (N, N)

        # row softmax (EUP reciprocal keeps the divide off the VALU path)
        s = s - jnp.max(s, axis=-1, keepdims=True)
        e = jnp.exp(s)
        p = e * pl.reciprocal(jnp.sum(e, axis=-1, keepdims=True), approx=False)

        head_outs.append(
            jnp.dot(p, vh, preferred_element_type=jnp.float32))       # (N, K)

    # Lane-dense slab of all head outputs: (N, H*K), column order h*K + k
    # (matches torch heads.permute(1,2,0,3).view(-1, H*K)).
    heads_flat = jnp.concatenate(head_outs, axis=-1)

    # Output projection + residual.
    y = jnp.dot(heads_flat, wo_ref[...],
                preferred_element_type=jnp.float32) + x               # (N, E)

    # 'layer' normalization of the reference module: per-batch mean / *unbiased*
    # variance over (graph, feature), no affine params.
    mu = jnp.mean(jnp.mean(y, axis=-1, keepdims=True), axis=0, keepdims=True)   # (1,1)
    d = y - mu
    ss = jnp.sum(jnp.sum(d * d, axis=-1, keepdims=True), axis=0, keepdims=True)  # (1,1)
    var = ss / (N * E - 1)
    o_ref[0] = d * jax.lax.rsqrt(var + eps)


def mha_sublayer_forward(params, x):
    """Forward of MultiHeadAttentionsubLayer (normalization='layer', mask=None)."""
    # TODO(synk): mask branch of MultiHeadAttention_AM not implemented -- the
    #             sublayer's forward never passes a mask.
    # TODO(synk): 'batch'/'instance' normalization variants not implemented;
    #             only the default 'layer' normalization path is translated.
    B, N, E = x.shape
    Wq, Wk, Wv, Wo = params['W_query'], params['W_key'], params['W_val'], params['W_out']
    H, _, K = Wq.shape
    norm_factor = 1.0 / math.sqrt(K)

    # Pack per-head weights into lane-dense slabs (host-side, one-time layout work):
    #   column block h*K:(h+1)*K of wq_cat is W_query[h], etc.
    wq_cat = jnp.transpose(Wq, (1, 0, 2)).reshape(E, H * K)
    wk_cat = jnp.transpose(Wk, (1, 0, 2)).reshape(E, H * K)
    wv_cat = jnp.transpose(Wv, (1, 0, 2)).reshape(E, H * K)
    wqkv = jnp.concatenate([wq_cat, wk_cat, wv_cat], axis=1)          # (E, 3*H*K)
    wo_cat = Wo.reshape(H * K, E)                                     # row h*K+k = W_out[h,k,:]

    kernel = functools.partial(_mha_sublayer_kernel, n_heads=H, key_dim=K,
                               norm_factor=norm_factor, eps=1e-5)
    return pl.pallas_call(
        kernel,
        out_shape=jax.ShapeDtypeStruct((B, N, E), jnp.float32),
        grid=(B,),
        in_specs=[
            pl.BlockSpec((1, N, E), lambda b: (b, 0, 0)),
            pl.BlockSpec((E, 3 * H * K), lambda b: (0, 0)),           # resident weights
            pl.BlockSpec((H * K, E), lambda b: (0, 0)),
        ],
        out_specs=pl.BlockSpec((1, N, E), lambda b: (b, 0, 0)),
        compiler_params=pltpu.CompilerParams(
            dimension_semantics=("parallel",)),                       # megacore over batch
    )(x, wqkv, wo_cat)


# ----------------------------------------------------------------------------
# Pure-JAX reference (mirrors the PyTorch forward exactly, for correctness check)
# ----------------------------------------------------------------------------
def reference_forward(params, x):
    B, N, E = x.shape
    Wq, Wk, Wv, Wo = params['W_query'], params['W_key'], params['W_val'], params['W_out']
    H, _, K = Wq.shape
    norm = 1.0 / math.sqrt(K)

    hflat = x.reshape(-1, E)
    Q = jnp.matmul(hflat, Wq).reshape(H, B, N, K)
    Km = jnp.matmul(hflat, Wk).reshape(H, B, N, K)
    V = jnp.matmul(hflat, Wv).reshape(H, B, N, K)
    compat = norm * jnp.matmul(Q, jnp.swapaxes(Km, 2, 3))             # (H, B, N, N)
    attn = jax.nn.softmax(compat, axis=-1)
    heads = jnp.matmul(attn, V)                                       # (H, B, N, K)
    out = (jnp.transpose(heads, (1, 2, 0, 3)).reshape(-1, H * K)
           @ Wo.reshape(-1, E)).reshape(B, N, E)

    y = out + x
    mu = jnp.mean(y, axis=(1, 2), keepdims=True)
    var = jnp.var(y, axis=(1, 2), keepdims=True, ddof=1)              # torch.var unbiased
    return (y - mu) / jnp.sqrt(var + 1e-5)


# ----------------------------------------------------------------------------
# Deterministic parameter init (mirrors module __init__ shapes & uniform stdv)
# ----------------------------------------------------------------------------
def init_params(key, n_heads, embed_dim):
    key_dim = embed_dim // n_heads

    def uni(k, shape, stdv):
        return jax.random.uniform(k, shape, jnp.float32, -stdv, stdv)

    ks = jax.random.split(key, 4)
    return {
        'W_query': uni(ks[0], (n_heads, embed_dim, key_dim), 1.0 / math.sqrt(key_dim)),
        'W_key':   uni(ks[1], (n_heads, embed_dim, key_dim), 1.0 / math.sqrt(key_dim)),
        'W_val':   uni(ks[2], (n_heads, embed_dim, key_dim), 1.0 / math.sqrt(key_dim)),
        'W_out':   uni(ks[3], (n_heads, key_dim, embed_dim), 1.0 / math.sqrt(embed_dim)),
    }


if __name__ == "__main__":
    n_heads = 4
    embed_dim = 32        # -> key_dim = val_dim = 8
    B, N = 2, 8           # batch, graph size

    root = jax.random.PRNGKey(0)
    pkey, dkey = jax.random.split(root)
    params = init_params(pkey, n_heads, embed_dim)
    x = jax.random.normal(dkey, (B, N, embed_dim), jnp.float32)

    out = mha_sublayer_forward(params, x)
    jax.block_until_ready(out)

    ref = reference_forward(params, x)
    np.testing.assert_allclose(np.asarray(out), np.asarray(ref), rtol=2e-3, atol=2e-3)

    print("KERNEL_OK")
</pallas_src>

<mosaic_0001>
module attributes {stable_mosaic.version = 11 : i64} {
  func.func @_mha_sublayer_kernel(%arg0: i32, %arg1: memref<1x8x32xf32, #tpu.memory_space<vmem>>, %arg2: memref<32x96xf32, #tpu.memory_space<vmem>>, %arg3: memref<32x32xf32, #tpu.memory_space<vmem>>, %arg4: memref<1x8x32xf32, #tpu.memory_space<vmem>>) attributes {dimension_semantics = [#tpu.dimension_semantics<parallel>], iteration_bounds = array<i64: 2>, scalar_prefetch = 0 : i64, scratch_operands = 0 : i64, tpu.core_type = #tpu.core_type<tc>, window_params = [{transform_indices = @transform_0, window_bounds = array<i64: 1, 8, 32>}, {pipeline_mode = #tpu.pipeline_mode<synchronous>, transform_indices = @transform_1, window_bounds = array<i64: 32, 96>}, {pipeline_mode = #tpu.pipeline_mode<synchronous>, transform_indices = @transform_2, window_bounds = array<i64: 32, 32>}, {transform_indices = @transform_3, window_bounds = array<i64: 1, 8, 32>}]} {
    %c0 = arith.constant 0 : index
    %c0_0 = arith.constant 0 : index
    %c0_1 = arith.constant 0 : index
    %0 = vector.load %arg1[%c0, %c0_0, %c0_1] : memref<1x8x32xf32, #tpu.memory_space<vmem>>, vector<1x8x32xf32>
    %1 = vector.shape_cast %0 : vector<1x8x32xf32> to vector<8x32xf32>
    %c0_2 = arith.constant 0 : index
    %c0_3 = arith.constant 0 : index
    %2 = vector.load %arg2[%c0_2, %c0_3] : memref<32x96xf32, #tpu.memory_space<vmem>>, vector<32x96xf32>
    %cst = arith.constant dense<0.000000e+00> : vector<8x96xf32>
    %3 = tpu.matmul %1, %2, %cst {dimension_numbers = #tpu.dot_dimension_numbers<[1], [0], [0], [1], [0, 0, 1, 1], [], []>} : vector<8x32xf32>, vector<32x96xf32>, vector<8x96xf32> -> vector<8x96xf32>
    %4 = vector.extract_strided_slice %3 {offsets = [0, 0], sizes = [8, 32], strides = [1, 1]} : vector<8x96xf32> to vector<8x32xf32>
    %5 = vector.extract_strided_slice %3 {offsets = [0, 32], sizes = [8, 32], strides = [1, 1]} : vector<8x96xf32> to vector<8x32xf32>
    %6 = vector.extract_strided_slice %3 {offsets = [0, 64], sizes = [8, 32], strides = [1, 1]} : vector<8x96xf32> to vector<8x32xf32>
    %7 = vector.extract_strided_slice %4 {offsets = [0, 0], sizes = [8, 8], strides = [1, 1]} : vector<8x32xf32> to vector<8x8xf32>
    %8 = vector.extract_strided_slice %5 {offsets = [0, 0], sizes = [8, 8], strides = [1, 1]} : vector<8x32xf32> to vector<8x8xf32>
    %9 = vector.extract_strided_slice %6 {offsets = [0, 0], sizes = [8, 8], strides = [1, 1]} : vector<8x32xf32> to vector<8x8xf32>
    %cst_4 = arith.constant dense<0.000000e+00> : vector<8x8xf32>
    %10 = tpu.matmul %7, %8, %cst_4 {dimension_numbers = #tpu.dot_dimension_numbers<[1], [1], [0], [0], [0, 0, 1, 0], [], []>} : vector<8x8xf32>, vector<8x8xf32>, vector<8x8xf32> -> vector<8x8xf32>
    %cst_5 = arith.constant 0.353553385 : f32
    %11 = vector.broadcast %cst_5 : f32 to vector<8x8xf32>
    %12 = arith.mulf %11, %10 : vector<8x8xf32>
    %cst_6 = arith.constant dense<0xFF800000> : vector<8xf32>
    %13 = vector.multi_reduction <maximumf>, %12, %cst_6 [1] : vector<8x8xf32> to vector<8xf32>
    %14 = vector.shape_cast %13 : vector<8xf32> to vector<8x1xf32>
    %15 = vector.broadcast %14 : vector<8x1xf32> to vector<8x8xf32>
    %16 = arith.subf %12, %15 : vector<8x8xf32>
    %17 = math.exp %16 : vector<8x8xf32>
    %cst_7 = arith.constant dense<0.000000e+00> : vector<8xf32>
    %18 = vector.multi_reduction <add>, %17, %cst_7 [1] : vector<8x8xf32> to vector<8xf32>
    %19 = vector.shape_cast %18 : vector<8xf32> to vector<8x1xf32>
    %20 = tpu.reciprocal %19 : vector<8x1xf32> -> vector<8x1xf32>
    %21 = vector.broadcast %20 : vector<8x1xf32> to vector<8x8xf32>
    %22 = arith.mulf %17, %21 : vector<8x8xf32>
    %cst_8 = arith.constant dense<0.000000e+00> : vector<8x8xf32>
    %23 = tpu.matmul %22, %9, %cst_8 {dimension_numbers = #tpu.dot_dimension_numbers<[1], [0], [0], [1], [0, 0, 1, 1], [], []>} : vector<8x8xf32>, vector<8x8xf32>, vector<8x8xf32> -> vector<8x8xf32>
    %24 = vector.extract_strided_slice %4 {offsets = [0, 8], sizes = [8, 8], strides = [1, 1]} : vector<8x32xf32> to vector<8x8xf32>
    %25 = vector.extract_strided_slice %5 {offsets = [0, 8], sizes = [8, 8], strides = [1, 1]} : vector<8x32xf32> to vector<8x8xf32>
    %26 = vector.extract_strided_slice %6 {offsets = [0, 8], sizes = [8, 8], strides = [1, 1]} : vector<8x32xf32> to vector<8x8xf32>
    %cst_9 = arith.constant dense<0.000000e+00> : vector<8x8xf32>
    %27 = tpu.matmul %24, %25, %cst_9 {dimension_numbers = #tpu.dot_dimension_numbers<[1], [1], [0], [0], [0, 0, 1, 0], [], []>} : vector<8x8xf32>, vector<8x8xf32>, vector<8x8xf32> -> vector<8x8xf32>
    %cst_10 = arith.constant 0.353553385 : f32
    %28 = vector.broadcast %cst_10 : f32 to vector<8x8xf32>
    %29 = arith.mulf %28, %27 : vector<8x8xf32>
    %cst_11 = arith.constant dense<0xFF800000> : vector<8xf32>
    %30 = vector.multi_reduction <maximumf>, %29, %cst_11 [1] : vector<8x8xf32> to vector<8xf32>
    %31 = vector.shape_cast %30 : vector<8xf32> to vector<8x1xf32>
    %32 = vector.broadcast %31 : vector<8x1xf32> to vector<8x8xf32>
    %33 = arith.subf %29, %32 : vector<8x8xf32>
    %34 = math.exp %33 : vector<8x8xf32>
    %cst_12 = arith.constant dense<0.000000e+00> : vector<8xf32>
    %35 = vector.multi_reduction <add>, %34, %cst_12 [1] : vector<8x8xf32> to vector<8xf32>
    %36 = vector.shape_cast %35 : vector<8xf32> to vector<8x1xf32>
    %37 = tpu.reciprocal %36 : vector<8x1xf32> -> vector<8x1xf32>
    %38 = vector.broadcast %37 : vector<8x1xf32> to vector<8x8xf32>
    %39 = arith.mulf %34, %38 : vector<8x8xf32>
    %cst_13 = arith.constant dense<0.000000e+00> : vector<8x8xf32>
    %40 = tpu.matmul %39, %26, %cst_13 {dimension_numbers = #tpu.dot_dimension_numbers<[1], [0], [0], [1], [0, 0, 1, 1], [], []>} : vector<8x8xf32>, vector<8x8xf32>, vector<8x8xf32> -> vector<8x8xf32>
    %41 = vector.extract_strided_slice %4 {offsets = [0, 16], sizes = [8, 8], strides = [1, 1]} : vector<8x32xf32> to vector<8x8xf32>
    %42 = vector.extract_strided_slice %5 {offsets = [0, 16], sizes = [8, 8], strides = [1, 1]} : vector<8x32xf32> to vector<8x8xf32>
    %43 = vector.extract_strided_slice %6 {offsets = [0, 16], sizes = [8, 8], strides = [1, 1]} : vector<8x32xf32> to vector<8x8xf32>
    %cst_14 = arith.constant dense<0.000000e+00> : vector<8x8xf32>
    %44 = tpu.matmul %41, %42, %cst_14 {dimension_numbers = #tpu.dot_dimension_numbers<[1], [1], [0], [0], [0, 0, 1, 0], [], []>} : vector<8x8xf32>, vector<8x8xf32>, vector<8x8xf32> -> vector<8x8xf32>
    %cst_15 = arith.constant 0.353553385 : f32
    %45 = vector.broadcast %cst_15 : f32 to vector<8x8xf32>
    %46 = arith.mulf %45, %44 : vector<8x8xf32>
    %cst_16 = arith.constant dense<0xFF800000> : vector<8xf32>
    %47 = vector.multi_reduction <maximumf>, %46, %cst_16 [1] : vector<8x8xf32> to vector<8xf32>
    %48 = vector.shape_cast %47 : vector<8xf32> to vector<8x1xf32>
    %49 = vector.broadcast %48 : vector<8x1xf32> to vector<8x8xf32>
    %50 = arith.subf %46, %49 : vector<8x8xf32>
    %51 = math.exp %50 : vector<8x8xf32>
    %cst_17 = arith.constant dense<0.000000e+00> : vector<8xf32>
    %52 = vector.multi_reduction <add>, %51, %cst_17 [1] : vector<8x8xf32> to vector<8xf32>
    %53 = vector.shape_cast %52 : vector<8xf32> to vector<8x1xf32>
    %54 = tpu.reciprocal %53 : vector<8x1xf32> -> vector<8x1xf32>
    %55 = vector.broadcast %54 : vector<8x1xf32> to vector<8x8xf32>
    %56 = arith.mulf %51, %55 : vector<8x8xf32>
    %cst_18 = arith.constant dense<0.000000e+00> : vector<8x8xf32>
    %57 = tpu.matmul %56, %43, %cst_18 {dimension_numbers = #tpu.dot_dimension_numbers<[1], [0], [0], [1], [0, 0, 1, 1], [], []>} : vector<8x8xf32>, vector<8x8xf32>, vector<8x8xf32> -> vector<8x8xf32>
    %58 = vector.extract_strided_slice %4 {offsets = [0, 24], sizes = [8, 8], strides = [1, 1]} : vector<8x32xf32> to vector<8x8xf32>
    %59 = vector.extract_strided_slice %5 {offsets = [0, 24], sizes = [8, 8], strides = [1, 1]} : vector<8x32xf32> to vector<8x8xf32>
    %60 = vector.extract_strided_slice %6 {offsets = [0, 24], sizes = [8, 8], strides = [1, 1]} : vector<8x32xf32> to vector<8x8xf32>
    %cst_19 = arith.constant dense<0.000000e+00> : vector<8x8xf32>
    %61 = tpu.matmul %58, %59, %cst_19 {dimension_numbers = #tpu.dot_dimension_numbers<[1], [1], [0], [0], [0, 0, 1, 0], [], []>} : vector<8x8xf32>, vector<8x8xf32>, vector<8x8xf32> -> vector<8x8xf32>
    %cst_20 = arith.constant 0.353553385 : f32
    %62 = vector.broadcast %cst_20 : f32 to vector<8x8xf32>
    %63 = arith.mulf %62, %61 : vector<8x8xf32>
    %cst_21 = arith.constant dense<0xFF800000> : vector<8xf32>
    %64 = vector.multi_reduction <maximumf>, %63, %cst_21 [1] : vector<8x8xf32> to vector<8xf32>
    %65 = vector.shape_cast %64 : vector<8xf32> to vector<8x1xf32>
    %66 = vector.broadcast %65 : vector<8x1xf32> to vector<8x8xf32>
    %67 = arith.subf %63, %66 : vector<8x8xf32>
    %68 = math.exp %67 : vector<8x8xf32>
    %cst_22 = arith.constant dense<0.000000e+00> : vector<8xf32>
    %69 = vector.multi_reduction <add>, %68, %cst_22 [1] : vector<8x8xf32> to vector<8xf32>
    %70 = vector.shape_cast %69 : vector<8xf32> to vector<8x1xf32>
    %71 = tpu.reciprocal %70 : vector<8x1xf32> -> vector<8x1xf32>
    %72 = vector.broadcast %71 : vector<8x1xf32> to vector<8x8xf32>
    %73 = arith.mulf %68, %72 : vector<8x8xf32>
    %cst_23 = arith.constant dense<0.000000e+00> : vector<8x8xf32>
    %74 = tpu.matmul %73, %60, %cst_23 {dimension_numbers = #tpu.dot_dimension_numbers<[1], [0], [0], [1], [0, 0, 1, 1], [], []>} : vector<8x8xf32>, vector<8x8xf32>, vector<8x8xf32> -> vector<8x8xf32>
    %75 = tpu.concatenate %23, %40, %57, %74 in 1 : vector<8x8xf32>, vector<8x8xf32>, vector<8x8xf32>, vector<8x8xf32> -> vector<8x32xf32>
    %c0_24 = arith.constant 0 : index
    %c0_25 = arith.constant 0 : index
    %76 = vector.load %arg3[%c0_24, %c0_25] : memref<32x32xf32, #tpu.memory_space<vmem>>, vector<32x32xf32>
    %cst_26 = arith.constant dense<0.000000e+00> : vector<8x32xf32>
    %77 = tpu.matmul %75, %76, %cst_26 {dimension_numbers = #tpu.dot_dimension_numbers<[1], [0], [0], [1], [0, 0, 1, 1], [], []>} : vector<8x32xf32>, vector<32x32xf32>, vector<8x32xf32> -> vector<8x32xf32>
    %78 = arith.addf %77, %1 : vector<8x32xf32>
    %cst_27 = arith.constant dense<0.000000e+00> : vector<8xf32>
    %79 = vector.multi_reduction <add>, %78, %cst_27 [1] : vector<8x32xf32> to vector<8xf32>
    %80 = vector.shape_cast %79 : vector<8xf32> to vector<8x1xf32>
    %cst_28 = arith.constant 3.200000e+01 : f32
    %81 = vector.broadcast %cst_28 : f32 to vector<8x1xf32>
    %82 = arith.divf %80, %81 : vector<8x1xf32>
    %cst_29 = arith.constant dense<0.000000e+00> : vector<1xf32>
    %83 = vector.multi_reduction <add>, %82, %cst_29 [0] : vector<8x1xf32> to vector<1xf32>
    %84 = vector.shape_cast %83 : vector<1xf32> to vector<1x1xf32>
    %cst_30 = arith.constant 8.000000e+00 : f32
    %85 = vector.broadcast %cst_30 : f32 to vector<1x1xf32>
    %86 = arith.divf %84, %85 : vector<1x1xf32>
    %87 = vector.broadcast %86 : vector<1x1xf32> to vector<8x32xf32>
    %88 = arith.subf %78, %87 : vector<8x32xf32>
    %89 = arith.mulf %88, %88 : vector<8x32xf32>
    %cst_31 = arith.constant dense<0.000000e+00> : vector<8xf32>
    %90 = vector.multi_reduction <add>, %89, %cst_31 [1] : vector<8x32xf32> to vector<8xf32>
    %91 = vector.shape_cast %90 : vector<8xf32> to vector<8x1xf32>
    %cst_32 = arith.constant dense<0.000000e+00> : vector<1xf32>
    %92 = vector.multi_reduction <add>, %91, %cst_32 [0] : vector<8x1xf32> to vector<1xf32>
    %93 = vector.shape_cast %92 : vector<1xf32> to vector<1x1xf32>
    %cst_33 = arith.constant 2.550000e+02 : f32
    %94 = vector.broadcast %cst_33 : f32 to vector<1x1xf32>
    %95 = arith.divf %93, %94 : vector<1x1xf32>
    %cst_34 = arith.constant 9.99999974E-6 : f32
    %96 = vector.broadcast %cst_34 : f32 to vector<1x1xf32>
    %97 = arith.addf %95, %96 : vector<1x1xf32>
    %98 = math.rsqrt %97 : vector<1x1xf32>
    %99 = vector.broadcast %98 : vector<1x1xf32> to vector<8x32xf32>
    %100 = arith.mulf %88, %99 : vector<8x32xf32>
    %c0_35 = arith.constant 0 : index
    %c0_36 = arith.constant 0 : index
    %c0_37 = arith.constant 0 : index
    %101 = vector.load %arg4[%c0_35, %c0_36, %c0_37] : memref<1x8x32xf32, #tpu.memory_space<vmem>>, vector<1x8x32xf32>
    %102 = vector.shape_cast %101 : vector<1x8x32xf32> to vector<8x32xf32>
    %103 = vector.shape_cast %100 : vector<8x32xf32> to vector<1x8x32xf32>
    tpu.vector_store %arg4[%c0_35, %c0_36, %c0_37], %103 {strides = array<i32>} : memref<1x8x32xf32, #tpu.memory_space<vmem>>, vector<1x8x32xf32>,
    return
  }
  func.func @transform_0(%arg0: i32) -> (i32, i32, i32) {
    %c0_i32 = arith.constant 0 : i32
    %c0_i32_0 = arith.constant 0 : i32
    %c0_i32_1 = arith.constant 0 : i32
    return %arg0, %c0_i32, %c0_i32_0 : i32, i32, i32
  }
  func.func @transform_1(%arg0: i32) -> (i32, i32) {
    %c0_i32 = arith.constant 0 : i32
    %c0_i32_0 = arith.constant 0 : i32
    %c0_i32_1 = arith.constant 0 : i32
    return %c0_i32, %c0_i32_0 : i32, i32
  }
  func.func @transform_2(%arg0: i32) -> (i32, i32) {
    %c0_i32 = arith.constant 0 : i32
    %c0_i32_0 = arith.constant 0 : i32
    %c0_i32_1 = arith.constant 0 : i32
    return %c0_i32, %c0_i32_0 : i32, i32
  }
  func.func @transform_3(%arg0: i32) -> (i32, i32, i32) {
    %c0_i32 = arith.constant 0 : i32
    %c0_i32_0 = arith.constant 0 : i32
    %c0_i32_1 = arith.constant 0 : i32
    return %arg0, %c0_i32, %c0_i32_0 : i32, i32, i32
  }
}

</mosaic_0001>

<llo_original>
// kernel: tpu_custom_call.1
$region0: #{tpu_custom_call.1}
  #allocation0 [shape = 'u32[]', space=smem, size = 0x4, offset = 0x4, fixed_abs, tag = 'smem constant byte address 0x4 - core index']
  #allocation1 [shape = 'u32[144,128]{1,0:T(1,128)}', space=vmem, size = 0x12000, scoped, tag = 'internal scratch']
  %s0 = inlined_call_operand.hbm [shape: f32[2,8,32], index: 0, kind: input, shape index: {}]
  %s1 = inlined_call_operand.hbm [shape: f32[32,96], index: 1, kind: input, shape index: {}]
  %s2 = inlined_call_operand.hbm [shape: f32[32,32], index: 2, kind: input, shape index: {}]
  %s3 = inlined_call_operand.hbm [shape: f32[2,8,32], index: 3, kind: output, shape index: {}]
  %s4 = sld [smem:[#allocation0]]
  $region57: #{tpu_custom_call.1} parent=0
    _
  %s6 = ssub.s32 1, %s4
  %s7 = scalar_select 0, %s6, %s4
  $region1: #{tpu_custom_call.1} parent=0
    #allocation2 [shape = 'u8[8192]{0}', space=vmem, size = 0x2000, scoped, tag = 'input window, operand 0']
    #allocation3 [shape = 's32[2]{0}', space=sflag, size = 0x8, scoped, tag = 'scoped memory for tpu_custom_call.1']
    #allocation4 [shape = 's32[2]{0}', space=sflag, size = 0x8, scoped, tag = 'scoped memory for tpu_custom_call.1']
    #allocation5 [shape = 'u8[16384]{0}', space=vmem, size = 0x4000, scoped, tag = 'input window, operand 1, single buffered']
    #allocation6 [shape = 's32[1]{0}', space=sflag, size = 0x4, scoped, tag = 'scoped memory for tpu_custom_call.1']
    #allocation7 [shape = 'u8[16384]{0}', space=vmem, size = 0x4000, scoped, tag = 'input window, operand 2, single buffered']
    #allocation8 [shape = 'u8[8192]{0}', space=vmem, size = 0x2000, scoped, tag = 'output window, operand 0']
    %8 = vsyncpa [#allocation3], 0
    %s9 = scalar_lea.sflag [#allocation3], 1
    %10 = vsyncpa %s9, 0
    %11 = vsyncpa [#allocation6], 0
    %12 = vsyncpa [#allocation4], 0
    %s13 = scalar_lea.sflag [#allocation4], 1
    %14 = vsyncpa %s13, 0
    loop: start=0, step=1, limit=4
    $region2: #{tpu_custom_call.1} parent=1 // loop_pre_header
      _
    $region3: #{tpu_custom_call.1} parent=1 // loop_header
      %s16 = sphi 0, %s20
      %p17 = scmp.ge.s32.totalorder %s16, 4
      %s26 = sphi 0, %s28
      %s29 = sphi 0, %s26
      %s30 = sphi 0, %s29
      %s46 = sphi 0, %s30
      %s50 = sphi 0, %s50
      %s52 = sphi 0, %s50
      %s53 = sphi 0, %s52
      %s67 = sphi 0, %s53
      %s71 = sphi 0, %s71
      %s73 = sphi 0, %s71
      %s74 = sphi 0, %s73
      %s88 = sphi 0, %s74
      %s94 = sphi 0, %s96
      %s97 = sphi 0, %s94
      %s98 = sphi 0, %s97
      %s114 = sphi 0, %s98
    $region4: #{tpu_custom_call.1} parent=1 // loop_header_branch
      %19 = sbr.rel (%p17) target = $region8
    $region5: #{tpu_custom_call.1} parent=1 // loop_body
      %s21 = ssub.s32 %s16, 1
      %s22 = ssub.s32 %s16, 2
      %s23 = sadd.s32 %s16, 1
      %s24 = ssub.s32 %s16, %s23
      %p25 = scmp.eq.s32.totalorder %s24, 0
      %s27 = sadd.s32 %s26, 1
      %s28 = scalar_select %p25, %s26, %s27
      %p31 = pneg %p25
      %p32 = scmp.eq.s32.totalorder %s16, 1
      %p33 = por %p31, %p32
      %p34 = scmp.ne.s32.totalorder %s26, %s29
      %p35 = scmp.eq.s32.totalorder %s16, 0
      %p36 = por %p34, %p35
      %p37 = scmp.ne.s32.totalorder %s26, %s29
      %p38 = scmp.eq.s32.totalorder %s21, 1
      %p39 = por %p37, %p38
      %p40 = scmp.ne.s32.totalorder %s29, %s30
      %p41 = scmp.eq.s32.totalorder %s21, 0
      %p42 = por %p40, %p41
      %p43 = scmp.ne.s32.totalorder %s29, %s30
      %p44 = scmp.eq.s32.totalorder %s22, 1
      %p45 = por %p43, %p44
      %p47 = scmp.ne.s32.totalorder %s30, %s46
      %p48 = scmp.eq.s32.totalorder %s22, 0
      %p49 = por %p47, %p48
      %s51 = sadd.s32 %s50, 1
      %p54 = scmp.eq.s32.totalorder %s16, 1
      %p55 = scmp.ne.s32.totalorder %s50, %s52
      %p56 = scmp.eq.s32.totalorder %s16, 0
      %p57 = por %p55, %p56
      %p58 = scmp.ne.s32.totalorder %s50, %s52
      %p59 = scmp.eq.s32.totalorder %s21, 1
      %p60 = por %p58, %p59
      %p61 = scmp.ne.s32.totalorder %s52, %s53
      %p62 = scmp.eq.s32.totalorder %s21, 0
      %p63 = por %p61, %p62
      %p64 = scmp.ne.s32.totalorder %s52, %s53
      %p65 = scmp.eq.s32.totalorder %s22, 1
      %p66 = por %p64, %p65
      %p68 = scmp.ne.s32.totalorder %s53, %s67
      %p69 = scmp.eq.s32.totalorder %s22, 0
      %p70 = por %p68, %p69
      %s72 = sadd.s32 %s71, 1
      %p75 = scmp.eq.s32.totalorder %s16, 1
      %p76 = scmp.ne.s32.totalorder %s71, %s73
      %p77 = scmp.eq.s32.totalorder %s16, 0
      %p78 = por %p76, %p77
      %p79 = scmp.ne.s32.totalorder %s71, %s73
      %p80 = scmp.eq.s32.totalorder %s21, 1
      %p81 = por %p79, %p80
      %p82 = scmp.ne.s32.totalorder %s73, %s74
      %p83 = scmp.eq.s32.totalorder %s21, 0
      %p84 = por %p82, %p83
      %p85 = scmp.ne.s32.totalorder %s73, %s74
      %p86 = scmp.eq.s32.totalorder %s22, 1
      %p87 = por %p85, %p86
      %p89 = scmp.ne.s32.totalorder %s74, %s88
      %p90 = scmp.eq.s32.totalorder %s22, 0
      %p91 = por %p89, %p90
      %s92 = ssub.s32 %s16, %s23
      %p93 = scmp.eq.s32.totalorder %s92, 0
      %s95 = sadd.s32 %s94, 1
      %s96 = scalar_select %p93, %s94, %s95
      %p99 = pneg %p93
      %p100 = scmp.eq.s32.totalorder %s16, 1
      %p101 = por %p99, %p100
      %p102 = scmp.ne.s32.totalorder %s94, %s97
      %p103 = scmp.eq.s32.totalorder %s16, 0
      %p104 = por %p102, %p103
      %p105 = scmp.ne.s32.totalorder %s94, %s97
      %p106 = scmp.eq.s32.totalorder %s21, 1
      %p107 = por %p105, %p106
      %p108 = scmp.ne.s32.totalorder %s97, %s98
      %p109 = scmp.eq.s32.totalorder %s21, 0
      %p110 = por %p108, %p109
      %p111 = scmp.ne.s32.totalorder %s97, %s98
      %p112 = scmp.eq.s32.totalorder %s22, 1
      %p113 = por %p111, %p112
      %p115 = scmp.ne.s32.totalorder %s98, %s114
      %p116 = scmp.eq.s32.totalorder %s22, 0
      %p117 = por %p115, %p116
      %p118 = scmp.le.s32.totalorder 1, %s16
      %p119 = scmp.lt.s32.totalorder %s16, 3
      %p120 = pnand %p118, %p119
      %p121 = pneg %p120
      // Predicated region
      $region9: #{tpu_custom_call.1} parent=5 // pred_check
        _
      $region10: #{tpu_custom_call.1} parent=5 // pred_check_branch
        %123 = sbr.rel (%p120) target = $region12
      $region11: #{tpu_custom_call.1} parent=5 // pred_region
        %s124 = ssub.s32 %s16, 1
        // Predicated region
        $region13: #{tpu_custom_call.1} parent=11 // pred_check
          %p125 = pneg %p63
        $region14: #{tpu_custom_call.1} parent=11 // pred_check_branch
          %127 = sbr.rel (%p125) target = $region16
        $region15: #{tpu_custom_call.1} parent=11 // pred_region
          %s129 = ssub.s32 512, 512
          %130 = vsyncadd [#allocation6], %s129
          %s131 = sshll.u32 [#allocation5], 4
          %s132 = int_to_ptr.vmem [resolvable:$true] %s131
          %137 = dma.hbm_to_vmem [thread:$0]  %s1, 512, %s132, [#allocation6], 128, 128, 8
        $region16: #{tpu_custom_call.1} parent=11 // pred_fallthru
          _
        // Predicated region
        $region17: #{tpu_custom_call.1} parent=11 // pred_check
          %p138 = pneg %p84
        $region18: #{tpu_custom_call.1} parent=11 // pred_check_branch
          %140 = sbr.rel (%p138) target = $region20
        $region19: #{tpu_custom_call.1} parent=11 // pred_region
          %s142 = ssub.s32 512, 512
          %143 = vsyncadd [#allocation6], %s142
          %s144 = sshll.u32 [#allocation7], 4
          %s145 = int_to_ptr.vmem [resolvable:$true] %s144
          %150 = dma.hbm_to_vmem [thread:$0]  %s2, 512, %s145, [#allocation6], 128, 128, 8
        $region20: #{tpu_custom_call.1} parent=11 // pred_fallthru
          _
      $region12: #{tpu_custom_call.1} parent=5 // pred_fallthru
        _
      %p151 = scmp.lt.s32.totalorder %s16, 2
      // Predicated region
      $region21: #{tpu_custom_call.1} parent=5 // pred_check
        %p152 = pneg %p151
      $region22: #{tpu_custom_call.1} parent=5 // pred_check_branch
        %154 = sbr.rel (%p152) target = $region24
      $region23: #{tpu_custom_call.1} parent=5 // pred_region
        // Predicated region
        $region25: #{tpu_custom_call.1} parent=23 // pred_check
          %p155 = pneg %p36
        $region26: #{tpu_custom_call.1} parent=23 // pred_check_branch
          %157 = sbr.rel (%p155) target = $region28
        $region27: #{tpu_custom_call.1} parent=23 // pred_region
          %s158 = sand.u32 %s26, 1
          %s159 = scalar_lea.sflag [#allocation3], %s158
          %s160 = sand.u32 %s26, 1
          %s161 = smul.addr %s160, 8
          %s162 = scalar_lea.vmem [#allocation2], %s161
          %s164 = ssub.s32 128, 128
          %165 = vsyncadd %s159, %s164
          %s166 = smul.addr %s16, 128
          %s167 = scalar_lea.hbm %s0, %s166
          %s169 = sshll.u32 %s162, 4
          %s170 = int_to_ptr.vmem [resolvable:$true] %s169
          %172 = dma.hbm_to_vmem [thread:$0]  %s167, 128, %s170, %s159
        $region28: #{tpu_custom_call.1} parent=23 // pred_fallthru
          _
      $region24: #{tpu_custom_call.1} parent=5 // pred_fallthru
        _
      %p173 = scmp.le.s32.totalorder 1, %s16
      %p174 = scmp.lt.s32.totalorder %s16, 3
      %p175 = pnand %p173, %p174
      %p176 = pneg %p175
      // Predicated region
      $region29: #{tpu_custom_call.1} parent=5 // pred_check
        _
      $region30: #{tpu_custom_call.1} parent=5 // pred_check_branch
        %178 = sbr.rel (%p175) target = $region32
      $region31: #{tpu_custom_call.1} parent=5 // pred_region
        %s179 = ssub.s32 %s16, 1
        %s180 = sand.u32 %s29, 1
        %s181 = scalar_lea.sflag [#allocation3], %s180
        %s182 = sand.u32 %s29, 1
        %s183 = smul.addr %s182, 8
        %s184 = scalar_lea.vmem [#allocation2], %s183
        // Predicated region
        $region33: #{tpu_custom_call.1} parent=31 // pred_check
          %p185 = pneg %p42
        $region34: #{tpu_custom_call.1} parent=31 // pred_check_branch
          %187 = sbr.rel (%p185) target = $region36
        $region35: #{tpu_custom_call.1} parent=31 // pred_region
          %188 = dma.done %s181, 128
        $region36: #{tpu_custom_call.1} parent=31 // pred_fallthru
          _
        // Predicated region
        $region37: #{tpu_custom_call.1} parent=31 // pred_check
          %p189 = pneg %p63
        $region38: #{tpu_custom_call.1} parent=31 // pred_check_branch
          %191 = sbr.rel (%p189) target = $region40
        $region39: #{tpu_custom_call.1} parent=31 // pred_region
          %192 = dma.done [#allocation6], 512
        $region40: #{tpu_custom_call.1} parent=31 // pred_fallthru
          _
        // Predicated region
        $region41: #{tpu_custom_call.1} parent=31 // pred_check
          %p193 = pneg %p84
        $region42: #{tpu_custom_call.1} parent=31 // pred_check_branch
          %195 = sbr.rel (%p193) target = $region44
        $region43: #{tpu_custom_call.1} parent=31 // pred_region
          %196 = dma.done [#allocation6], 512
        $region44: #{tpu_custom_call.1} parent=31 // pred_fallthru
          _
        %s197 = sand.u32 %s29, 1
        %s198 = scalar_lea.sflag [#allocation3], %s197
        %s199 = sand.u32 %s29, 1
        %s200 = smul.addr %s199, 8
        %s201 = scalar_lea.vmem [#allocation2], %s200
        %p202 = pneg %p42
        %p203 = pneg %p39
        %p204 = pneg %p63
        %p205 = pneg %p60
        %p206 = pneg %p84
        %p207 = pneg %p81
        %p208 = pneg %p110
        %p209 = pneg %p107
        %s210 = sand.u32 %s97, 1
        %s211 = scalar_lea.sflag [#allocation4], %s210
        %s212 = sand.u32 %s97, 1
        %s213 = smul.addr %s212, 8
        %s214 = scalar_lea.vmem [#allocation8], %s213
        %v215 = vld [vmem:[%s184] sm:$0xff]
        %v216 = vld [vmem:[#allocation5] sm:$0xff]
        %v217 = vld [vmem:[#allocation5 + $0x8] sm:$0xff]
        %v218 = vld [vmem:[#allocation5 + $0x10] sm:$0xff]
        %v219 = vld [vmem:[#allocation5 + $0x18] sm:$0xff]
        %vm220 = vcmask 261120
        %v222 = vsel %vm220, %v215, 0
        %224 = vmatprep.subr.mxu0 0.0
        %225 = vmatpush1.msra.mxu0 %v216
        %226 = vmatprep.subr.mxu0 0.0
        %227 = vmatpush1.msra.mxu0 %v217
        %228 = vmatprep.subr.mxu0 0.0
        %229 = vmatpush1.msra.mxu0 %v218
        %230 = vmatprep.subr.mxu0 0.0
        %231 = vmatpush1.msra.mxu0 %v219
        %232 = vmatprep.subr.mxu0 0.0
        %233 = vmatpush1.msra.mxu0 0.0
        %234 = vmatprep.subr.mxu0 0.0
        %235 = vmatpush1.msra.mxu0 0.0
        %236 = vmatprep.subr.mxu0 0.0
        %237 = vmatpush1.msra.mxu0 0.0
        %238 = vmatprep.subr.mxu0 0.0
        %239 = vmatpush1.msra.mxu0 0.0
        %240 = vmatprep.subr.mxu0 0.0
        %241 = vmatpush1.msra.mxu0 0.0
        %242 = vmatprep.subr.mxu0 0.0
        %243 = vmatpush1.msra.mxu0 0.0
        %244 = vmatprep.subr.mxu0 0.0
        %245 = vmatpush1.msra.mxu0 0.0
        %246 = vmatprep.subr.mxu0 0.0
        %247 = vmatpush1.msra.mxu0 0.0
        %248 = vmatprep.subr.mxu0 0.0
        %249 = vmatpush1.msra.mxu0 0.0
        %250 = vmatprep.subr.mxu0 0.0
        %251 = vmatpush1.msra.mxu0 0.0
        %252 = vmatprep.subr.mxu0 0.0
        %253 = vmatpush1.msra.mxu0 0.0
        %254 = vmatprep.subr.mxu0 0.0
        %255 = vmatpush1.msra.mxu0 0.0
        %256 = vmatprep.subr.mxu0 0.0
        %257 = vmatpush1.msra.mxu0 0.0
        %258 = vmatprep.subr.mxu0 0.0
        %259 = vmatpush1.msra.mxu0 0.0
        %260 = vmatprep.subr.mxu0 0.0
        %261 = vmatpush1.msra.mxu0 0.0
        %262 = vmatprep.subr.mxu0 0.0
        %263 = vmatpush1.msra.mxu0 0.0
        %264 = vmatprep.subr.mxu0 0.0
        %265 = vmatpush1.msra.mxu0 0.0
        %266 = vmatprep.subr.mxu0 0.0
        %267 = vmatpush1.msra.mxu0 0.0
        %268 = vmatprep.subr.mxu0 0.0
        %269 = vmatpush1.msra.mxu0 0.0
        %270 = vmatprep.subr.mxu0 0.0
        %271 = vmatpush1.msra.mxu0 0.0
        %272 = vmatprep.subr.mxu0 0.0
        %273 = vmatpush1.msra.mxu0 0.0
        %274 = vmatprep.subr.mxu0 0.0
        %275 = vmatpush1.msra.mxu0 0.0
        %276 = vmatprep.subr.mxu0 0.0
        %277 = vmatpush1.msra.mxu0 0.0
        %278 = vmatprep.subr.mxu0 0.0
        %279 = vmatpush1.msra.mxu0 0.0
        %280 = vmatprep.subr.mxu0 0.0
        %281 = vmatpush1.msra.mxu0 0.0
        %282 = vmatprep.subr.mxu0 0.0
        %283 = vmatpush1.msra.mxu0 0.0
        %284 = vmatprep.subr.mxu0 0.0
        %285 = vmatpush1.msra.mxu0 0.0
        %286 = vmatprep.subr.mxu0 0.0
        %287 = vmatpush1.msra.mxu0 0.0
        %288 = vmatprep.mubr.f32.mxu0 0.0
        %289 = vmatmul.mubr.f32.gmra.mrb[0].mxu0 %v222
        %v290 = vpop.f32.mrb[0].mxu0
        %v291 = vadd.f32 0.0, %v290
        %v292 = vpop.f32.mrb[0].mxu0
        %293 = vdwg.mxu0
        %295 = vrot.lane.b32.xlu0 %v291, 96
        %v296 = vpop.permute.xlu0 %295
        %vm297 = vcmask 64512
        %v298 = vsel %vm297, %v291, 0
        %v300 = vsel %vm297, %v296, 0
        %302 = vmatprep.subr.mxu0 0.0
        %303 = vmatpush1.xpose.msra.mxu0 %v300
        %304 = vmatprep.subr.mxu0 0.0
        %305 = vmatpush1.xpose.msra.mxu0 0.0
        %306 = vmatprep.subr.mxu0 0.0
        %307 = vmatpush1.xpose.msra.mxu0 0.0
        %308 = vmatprep.subr.mxu0 0.0
        %309 = vmatpush1.xpose.msra.mxu0 0.0
        %310 = vmatprep.subr.mxu0 0.0
        %311 = vmatpush1.xpose.msra.mxu0 0.0
        %312 = vmatprep.subr.mxu0 0.0
        %313 = vmatpush1.xpose.msra.mxu0 0.0
        %314 = vmatprep.subr.mxu0 0.0
        %315 = vmatpush1.xpose.msra.mxu0 0.0
        %316 = vmatprep.subr.mxu0 0.0
        %317 = vmatpush1.xpose.msra.mxu0 0.0
        %318 = vmatprep.subr.mxu0 0.0
        %319 = vmatpush1.xpose.msra.mxu0 0.0
        %320 = vmatprep.subr.mxu0 0.0
        %321 = vmatpush1.xpose.msra.mxu0 0.0
        %322 = vmatprep.subr.mxu0 0.0
        %323 = vmatpush1.xpose.msra.mxu0 0.0
        %324 = vmatprep.subr.mxu0 0.0
        %325 = vmatpush1.xpose.msra.mxu0 0.0
        %326 = vmatprep.subr.mxu0 0.0
        %327 = vmatpush1.xpose.msra.mxu0 0.0
        %328 = vmatprep.subr.mxu0 0.0
        %329 = vmatpush1.xpose.msra.mxu0 0.0
        %330 = vmatprep.subr.mxu0 0.0
        %331 = vmatpush1.xpose.msra.mxu0 0.0
        %332 = vmatprep.subr.mxu0 0.0
        %333 = vmatpush1.xpose.msra.mxu0 0.0
        %334 = vmatprep.subr.mxu0 0.0
        %335 = vmatpush1.xpose.msra.mxu0 0.0
        %336 = vmatprep.subr.mxu0 0.0
        %337 = vmatpush1.xpose.msra.mxu0 0.0
        %338 = vmatprep.subr.mxu0 0.0
        %339 = vmatpush1.xpose.msra.mxu0 0.0
        %340 = vmatprep.subr.mxu0 0.0
        %341 = vmatpush1.xpose.msra.mxu0 0.0
        %342 = vmatprep.subr.mxu0 0.0
        %343 = vmatpush1.xpose.msra.mxu0 0.0
        %344 = vmatprep.subr.mxu0 0.0
        %345 = vmatpush1.xpose.msra.mxu0 0.0
        %346 = vmatprep.subr.mxu0 0.0
        %347 = vmatpush1.xpose.msra.mxu0 0.0
        %348 = vmatprep.subr.mxu0 0.0
        %349 = vmatpush1.xpose.msra.mxu0 0.0
        %350 = vmatprep.subr.mxu0 0.0
        %351 = vmatpush1.xpose.msra.mxu0 0.0
        %352 = vmatprep.subr.mxu0 0.0
        %353 = vmatpush1.xpose.msra.mxu0 0.0
        %354 = vmatprep.subr.mxu0 0.0
        %355 = vmatpush1.xpose.msra.mxu0 0.0
        %356 = vmatprep.subr.mxu0 0.0
        %357 = vmatpush1.xpose.msra.mxu0 0.0
        %358 = vmatprep.subr.mxu0 0.0
        %359 = vmatpush1.xpose.msra.mxu0 0.0
        %360 = vmatprep.subr.mxu0 0.0
        %361 = vmatpush1.xpose.msra.mxu0 0.0
        %362 = vmatprep.subr.mxu0 0.0
        %363 = vmatpush1.xpose.msra.mxu0 0.0
        %364 = vmatprep.subr.mxu0 0.0
        %365 = vmatpush1.xpose.msra.mxu0 0.0
        %366 = vmatprep.mubr.f32.mxu0 0.0
        %367 = vmatmul.mubr.f32.gmra.mrb[0].mxu0 %v298
        %v368 = vpop.f32.mrb[0].mxu0
        %v369 = vadd.f32 0.0, %v368
        %v370 = vpop.f32.mrb[0].mxu0
        %371 = vdwg.mxu0
        %v372 = vmul.f32 %v369, 0.35355338
        %v373 = vsel %vm297, %v372, -inf
        %374 = vmax.xlane.f32.xlu0 %v373
        %v375 = vpop.xlane.xlu0 %374
        %v376 = vsub.f32 %v372, %v375
        %v377 = vmul.f32 %v376, 1.442695
        %v378 = vpow.pop %v377
        %v379 = vsel %vm297, %v378, 0.0
        %380 = vadd.xlane.f32.xlu0 %v379
        %v381 = vpop.xlane.xlu0 %380
        %v382 = vrcp.pop %v381
        %v383 = vmul.f32 %v378, %v382
        %384 = vrot.lane.b32.xlu0 %v291, 64
        %v385 = vpop.permute.xlu0 %384
        %v388 = vsel %vm297, %v383, 0
        %390 = vmatprep.subr.mxu0 0.0
        %391 = vmatpush1.msra.mxu0 %v385
        %392 = vmatprep.subr.mxu0 0.0
        %393 = vmatpush1.msra.mxu0 0.0
        %394 = vmatprep.subr.mxu0 0.0
        %395 = vmatpush1.msra.mxu0 0.0
        %396 = vmatprep.subr.mxu0 0.0
        %397 = vmatpush1.msra.mxu0 0.0
        %398 = vmatprep.subr.mxu0 0.0
        %399 = vmatpush1.msra.mxu0 0.0
        %400 = vmatprep.subr.mxu0 0.0
        %401 = vmatpush1.msra.mxu0 0.0
        %402 = vmatprep.subr.mxu0 0.0
        %403 = vmatpush1.msra.mxu0 0.0
        %404 = vmatprep.subr.mxu0 0.0
        %405 = vmatpush1.msra.mxu0 0.0
        %406 = vmatprep.subr.mxu0 0.0
        %407 = vmatpush1.msra.mxu0 0.0
        %408 = vmatprep.subr.mxu0 0.0
        %409 = vmatpush1.msra.mxu0 0.0
        %410 = vmatprep.subr.mxu0 0.0
        %411 = vmatpush1.msra.mxu0 0.0
        %412 = vmatprep.subr.mxu0 0.0
        %413 = vmatpush1.msra.mxu0 0.0
        %414 = vmatprep.subr.mxu0 0.0
        %415 = vmatpush1.msra.mxu0 0.0
        %416 = vmatprep.subr.mxu0 0.0
        %417 = vmatpush1.msra.mxu0 0.0
        %418 = vmatprep.subr.mxu0 0.0
        %419 = vmatpush1.msra.mxu0 0.0
        %420 = vmatprep.subr.mxu0 0.0
        %421 = vmatpush1.msra.mxu0 0.0
        %422 = vmatprep.subr.mxu0 0.0
        %423 = vmatpush1.msra.mxu0 0.0
        %424 = vmatprep.subr.mxu0 0.0
        %425 = vmatpush1.msra.mxu0 0.0
        %426 = vmatprep.subr.mxu0 0.0
        %427 = vmatpush1.msra.mxu0 0.0
        %428 = vmatprep.subr.mxu0 0.0
        %429 = vmatpush1.msra.mxu0 0.0
        %430 = vmatprep.subr.mxu0 0.0
        %431 = vmatpush1.msra.mxu0 0.0
        %432 = vmatprep.subr.mxu0 0.0
        %433 = vmatpush1.msra.mxu0 0.0
        %434 = vmatprep.subr.mxu0 0.0
        %435 = vmatpush1.msra.mxu0 0.0
        %436 = vmatprep.subr.mxu0 0.0
        %437 = vmatpush1.msra.mxu0 0.0
        %438 = vmatprep.subr.mxu0 0.0
        %439 = vmatpush1.msra.mxu0 0.0
        %440 = vmatprep.subr.mxu0 0.0
        %441 = vmatpush1.msra.mxu0 0.0
        %442 = vmatprep.subr.mxu0 0.0
        %443 = vmatpush1.msra.mxu0 0.0
        %444 = vmatprep.subr.mxu0 0.0
        %445 = vmatpush1.msra.mxu0 0.0
        %446 = vmatprep.subr.mxu0 0.0
        %447 = vmatpush1.msra.mxu0 0.0
        %448 = vmatprep.subr.mxu0 0.0
        %449 = vmatpush1.msra.mxu0 0.0
        %450 = vmatprep.subr.mxu0 0.0
        %451 = vmatpush1.msra.mxu0 0.0
        %452 = vmatprep.subr.mxu0 0.0
        %453 = vmatpush1.msra.mxu0 0.0
        %454 = vmatprep.mubr.f32.mxu0 0.0
        %455 = vmatmul.mubr.f32.gmra.mrb[0].mxu0 %v388
        %v456 = vpop.f32.mrb[0].mxu0
        %v457 = vadd.f32 0.0, %v456
        %v458 = vpop.f32.mrb[0].mxu0
        %459 = vdwg.mxu0
        %460 = vrot.lane.b32.xlu0 %v291, 120
        %v461 = vpop.permute.xlu0 %460
        %462 = vrot.lane.b32.xlu0 %v291, 88
        %v463 = vpop.permute.xlu0 %462
        %v464 = vsel %vm297, %v461, 0
        %v466 = vsel %vm297, %v463, 0
        %468 = vmatprep.subr.mxu0 0.0
        %469 = vmatpush1.xpose.msra.mxu0 %v466
        %470 = vmatprep.subr.mxu0 0.0
        %471 = vmatpush1.xpose.msra.mxu0 0.0
        %472 = vmatprep.subr.mxu0 0.0
        %473 = vmatpush1.xpose.msra.mxu0 0.0
        %474 = vmatprep.subr.mxu0 0.0
        %475 = vmatpush1.xpose.msra.mxu0 0.0
        %476 = vmatprep.subr.mxu0 0.0
        %477 = vmatpush1.xpose.msra.mxu0 0.0
        %478 = vmatprep.subr.mxu0 0.0
        %479 = vmatpush1.xpose.msra.mxu0 0.0
        %480 = vmatprep.subr.mxu0 0.0
        %481 = vmatpush1.xpose.msra.mxu0 0.0
        %482 = vmatprep.subr.mxu0 0.0
        %483 = vmatpush1.xpose.msra.mxu0 0.0
        %484 = vmatprep.subr.mxu0 0.0
        %485 = vmatpush1.xpose.msra.mxu0 0.0
        %486 = vmatprep.subr.mxu0 0.0
        %487 = vmatpush1.xpose.msra.mxu0 0.0
        %488 = vmatprep.subr.mxu0 0.0
        %489 = vmatpush1.xpose.msra.mxu0 0.0
        %490 = vmatprep.subr.mxu0 0.0
        %491 = vmatpush1.xpose.msra.mxu0 0.0
        %492 = vmatprep.subr.mxu0 0.0
        %493 = vmatpush1.xpose.msra.mxu0 0.0
        %494 = vmatprep.subr.mxu0 0.0
        %495 = vmatpush1.xpose.msra.mxu0 0.0
        %496 = vmatprep.subr.mxu0 0.0
        %497 = vmatpush1.xpose.msra.mxu0 0.0
        %498 = vmatprep.subr.mxu0 0.0
        %499 = vmatpush1.xpose.msra.mxu0 0.0
        %500 = vmatprep.subr.mxu0 0.0
        %501 = vmatpush1.xpose.msra.mxu0 0.0
        %502 = vmatprep.subr.mxu0 0.0
        %503 = vmatpush1.xpose.msra.mxu0 0.0
        %504 = vmatprep.subr.mxu0 0.0
        %505 = vmatpush1.xpose.msra.mxu0 0.0
        %506 = vmatprep.subr.mxu0 0.0
        %507 = vmatpush1.xpose.msra.mxu0 0.0
        %508 = vmatprep.subr.mxu0 0.0
        %509 = vmatpush1.xpose.msra.mxu0 0.0
        %510 = vmatprep.subr.mxu0 0.0
        %511 = vmatpush1.xpose.msra.mxu0 0.0
        %512 = vmatprep.subr.mxu0 0.0
        %513 = vmatpush1.xpose.msra.mxu0 0.0
        %514 = vmatprep.subr.mxu0 0.0
        %515 = vmatpush1.xpose.msra.mxu0 0.0
        %516 = vmatprep.subr.mxu0 0.0
        %517 = vmatpush1.xpose.msra.mxu0 0.0
        %518 = vmatprep.subr.mxu0 0.0
        %519 = vmatpush1.xpose.msra.mxu0 0.0
        %520 = vmatprep.subr.mxu0 0.0
        %521 = vmatpush1.xpose.msra.mxu0 0.0
        %522 = vmatprep.subr.mxu0 0.0
        %523 = vmatpush1.xpose.msra.mxu0 0.0
        %524 = vmatprep.subr.mxu0 0.0
        %525 = vmatpush1.xpose.msra.mxu0 0.0
        %526 = vmatprep.subr.mxu0 0.0
        %527 = vmatpush1.xpose.msra.mxu0 0.0
        %528 = vmatprep.subr.mxu0 0.0
        %529 = vmatpush1.xpose.msra.mxu0 0.0
        %530 = vmatprep.subr.mxu0 0.0
        %531 = vmatpush1.xpose.msra.mxu0 0.0
        %532 = vmatprep.mubr.f32.mxu0 0.0
        %533 = vmatmul.mubr.f32.gmra.mrb[0].mxu0 %v464
        %v534 = vpop.f32.mrb[0].mxu0
        %v535 = vadd.f32 0.0, %v534
        %v536 = vpop.f32.mrb[0].mxu0
        %537 = vdwg.mxu0
        %v538 = vmul.f32 %v535, 0.35355338
        %v539 = vsel %vm297, %v538, -inf
        %540 = vmax.xlane.f32.xlu0 %v539
        %v541 = vpop.xlane.xlu0 %540
        %v542 = vsub.f32 %v538, %v541
        %v543 = vmul.f32 %v542, 1.442695
        %v544 = vpow.pop %v543
        %v545 = vsel %vm297, %v544, 0.0
        %546 = vadd.xlane.f32.xlu0 %v545
        %v547 = vpop.xlane.xlu0 %546
        %v548 = vrcp.pop %v547
        %v549 = vmul.f32 %v544, %v548
        %550 = vrot.lane.b32.xlu0 %v291, 56
        %v551 = vpop.permute.xlu0 %550
        %v554 = vsel %vm297, %v549, 0
        %556 = vmatprep.subr.mxu0 0.0
        %557 = vmatpush1.msra.mxu0 %v551
        %558 = vmatprep.subr.mxu0 0.0
        %559 = vmatpush1.msra.mxu0 0.0
        %560 = vmatprep.subr.mxu0 0.0
        %561 = vmatpush1.msra.mxu0 0.0
        %562 = vmatprep.subr.mxu0 0.0
        %563 = vmatpush1.msra.mxu0 0.0
        %564 = vmatprep.subr.mxu0 0.0
        %565 = vmatpush1.msra.mxu0 0.0
        %566 = vmatprep.subr.mxu0 0.0
        %567 = vmatpush1.msra.mxu0 0.0
        %568 = vmatprep.subr.mxu0 0.0
        %569 = vmatpush1.msra.mxu0 0.0
        %570 = vmatprep.subr.mxu0 0.0
        %571 = vmatpush1.msra.mxu0 0.0
        %572 = vmatprep.subr.mxu0 0.0
        %573 = vmatpush1.msra.mxu0 0.0
        %574 = vmatprep.subr.mxu0 0.0
        %575 = vmatpush1.msra.mxu0 0.0
        %576 = vmatprep.subr.mxu0 0.0
        %577 = vmatpush1.msra.mxu0 0.0
        %578 = vmatprep.subr.mxu0 0.0
        %579 = vmatpush1.msra.mxu0 0.0
        %580 = vmatprep.subr.mxu0 0.0
        %581 = vmatpush1.msra.mxu0 0.0
        %582 = vmatprep.subr.mxu0 0.0
        %583 = vmatpush1.msra.mxu0 0.0
        %584 = vmatprep.subr.mxu0 0.0
        %585 = vmatpush1.msra.mxu0 0.0
        %586 = vmatprep.subr.mxu0 0.0
        %587 = vmatpush1.msra.mxu0 0.0
        %588 = vmatprep.subr.mxu0 0.0
        %589 = vmatpush1.msra.mxu0 0.0
        %590 = vmatprep.subr.mxu0 0.0
        %591 = vmatpush1.msra.mxu0 0.0
        %592 = vmatprep.subr.mxu0 0.0
        %593 = vmatpush1.msra.mxu0 0.0
        %594 = vmatprep.subr.mxu0 0.0
        %595 = vmatpush1.msra.mxu0 0.0
        %596 = vmatprep.subr.mxu0 0.0
        %597 = vmatpush1.msra.mxu0 0.0
        %598 = vmatprep.subr.mxu0 0.0
        %599 = vmatpush1.msra.mxu0 0.0
        %600 = vmatprep.subr.mxu0 0.0
        %601 = vmatpush1.msra.mxu0 0.0
        %602 = vmatprep.subr.mxu0 0.0
        %603 = vmatpush1.msra.mxu0 0.0
        %604 = vmatprep.subr.mxu0 0.0
        %605 = vmatpush1.msra.mxu0 0.0
        %606 = vmatprep.subr.mxu0 0.0
        %607 = vmatpush1.msra.mxu0 0.0
        %608 = vmatprep.subr.mxu0 0.0
        %609 = vmatpush1.msra.mxu0 0.0
        %610 = vmatprep.subr.mxu0 0.0
        %611 = vmatpush1.msra.mxu0 0.0
        %612 = vmatprep.subr.mxu0 0.0
        %613 = vmatpush1.msra.mxu0 0.0
        %614 = vmatprep.subr.mxu0 0.0
        %615 = vmatpush1.msra.mxu0 0.0
        %616 = vmatprep.subr.mxu0 0.0
        %617 = vmatpush1.msra.mxu0 0.0
        %618 = vmatprep.subr.mxu0 0.0
        %619 = vmatpush1.msra.mxu0 0.0
        %620 = vmatprep.mubr.f32.mxu0 0.0
        %621 = vmatmul.mubr.f32.gmra.mrb[0].mxu0 %v554
        %v622 = vpop.f32.mrb[0].mxu0
        %v623 = vadd.f32 0.0, %v622
        %v624 = vpop.f32.mrb[0].mxu0
        %625 = vdwg.mxu0
        %626 = vrot.lane.b32.xlu0 %v291, 112
        %v627 = vpop.permute.xlu0 %626
        %628 = vrot.lane.b32.xlu0 %v291, 80
        %v629 = vpop.permute.xlu0 %628
        %v630 = vsel %vm297, %v627, 0
        %v632 = vsel %vm297, %v629, 0
        %634 = vmatprep.subr.mxu0 0.0
        %635 = vmatpush1.xpose.msra.mxu0 %v632
        %636 = vmatprep.subr.mxu0 0.0
        %637 = vmatpush1.xpose.msra.mxu0 0.0
        %638 = vmatprep.subr.mxu0 0.0
        %639 = vmatpush1.xpose.msra.mxu0 0.0
        %640 = vmatprep.subr.mxu0 0.0
        %641 = vmatpush1.xpose.msra.mxu0 0.0
        %642 = vmatprep.subr.mxu0 0.0
        %643 = vmatpush1.xpose.msra.mxu0 0.0
        %644 = vmatprep.subr.mxu0 0.0
        %645 = vmatpush1.xpose.msra.mxu0 0.0
        %646 = vmatprep.subr.mxu0 0.0
        %647 = vmatpush1.xpose.msra.mxu0 0.0
        %648 = vmatprep.subr.mxu0 0.0
        %649 = vmatpush1.xpose.msra.mxu0 0.0
        %650 = vmatprep.subr.mxu0 0.0
        %651 = vmatpush1.xpose.msra.mxu0 0.0
        %652 = vmatprep.subr.mxu0 0.0
        %653 = vmatpush1.xpose.msra.mxu0 0.0
        %654 = vmatprep.subr.mxu0 0.0
        %655 = vmatpush1.xpose.msra.mxu0 0.0
        %656 = vmatprep.subr.mxu0 0.0
        %657 = vmatpush1.xpose.msra.mxu0 0.0
        %658 = vmatprep.subr.mxu0 0.0
        %659 = vmatpush1.xpose.msra.mxu0 0.0
        %660 = vmatprep.subr.mxu0 0.0
        %661 = vmatpush1.xpose.msra.mxu0 0.0
        %662 = vmatprep.subr.mxu0 0.0
        %663 = vmatpush1.xpose.msra.mxu0 0.0
        %664 = vmatprep.subr.mxu0 0.0
        %665 = vmatpush1.xpose.msra.mxu0 0.0
        %666 = vmatprep.subr.mxu0 0.0
        %667 = vmatpush1.xpose.msra.mxu0 0.0
        %668 = vmatprep.subr.mxu0 0.0
        %669 = vmatpush1.xpose.msra.mxu0 0.0
        %670 = vmatprep.subr.mxu0 0.0
        %671 = vmatpush1.xpose.msra.mxu0 0.0
        %672 = vmatprep.subr.mxu0 0.0
        %673 = vmatpush1.xpose.msra.mxu0 0.0
        %674 = vmatprep.subr.mxu0 0.0
        %675 = vmatpush1.xpose.msra.mxu0 0.0
        %676 = vmatprep.subr.mxu0 0.0
        %677 = vmatpush1.xpose.msra.mxu0 0.0
        %678 = vmatprep.subr.mxu0 0.0
        %679 = vmatpush1.xpose.msra.mxu0 0.0
        %680 = vmatprep.subr.mxu0 0.0
        %681 = vmatpush1.xpose.msra.mxu0 0.0
        %682 = vmatprep.subr.mxu0 0.0
        %683 = vmatpush1.xpose.msra.mxu0 0.0
        %684 = vmatprep.subr.mxu0 0.0
        %685 = vmatpush1.xpose.msra.mxu0 0.0
        %686 = vmatprep.subr.mxu0 0.0
        %687 = vmatpush1.xpose.msra.mxu0 0.0
        %688 = vmatprep.subr.mxu0 0.0
        %689 = vmatpush1.xpose.msra.mxu0 0.0
        %690 = vmatprep.subr.mxu0 0.0
        %691 = vmatpush1.xpose.msra.mxu0 0.0
        %692 = vmatprep.subr.mxu0 0.0
        %693 = vmatpush1.xpose.msra.mxu0 0.0
        %694 = vmatprep.subr.mxu0 0.0
        %695 = vmatpush1.xpose.msra.mxu0 0.0
        %696 = vmatprep.subr.mxu0 0.0
        %697 = vmatpush1.xpose.msra.mxu0 0.0
        %698 = vmatprep.mubr.f32.mxu0 0.0
        %699 = vmatmul.mubr.f32.gmra.mrb[0].mxu0 %v630
        %v700 = vpop.f32.mrb[0].mxu0
        %v701 = vadd.f32 0.0, %v700
        %v702 = vpop.f32.mrb[0].mxu0
        %703 = vdwg.mxu0
        %v704 = vmul.f32 %v701, 0.35355338
        %v705 = vsel %vm297, %v704, -inf
        %706 = vmax.xlane.f32.xlu0 %v705
        %v707 = vpop.xlane.xlu0 %706
        %v708 = vsub.f32 %v704, %v707
        %v709 = vmul.f32 %v708, 1.442695
        %v710 = vpow.pop %v709
        %v711 = vsel %vm297, %v710, 0.0
        %712 = vadd.xlane.f32.xlu0 %v711
        %v713 = vpop.xlane.xlu0 %712
        %v714 = vrcp.pop %v713
        %v715 = vmul.f32 %v710, %v714
        %716 = vrot.lane.b32.xlu0 %v291, 48
        %v717 = vpop.permute.xlu0 %716
        %v720 = vsel %vm297, %v715, 0
        %722 = vmatprep.subr.mxu0 0.0
        %723 = vmatpush1.msra.mxu0 %v717
        %724 = vmatprep.subr.mxu0 0.0
        %725 = vmatpush1.msra.mxu0 0.0
        %726 = vmatprep.subr.mxu0 0.0
        %727 = vmatpush1.msra.mxu0 0.0
        %728 = vmatprep.subr.mxu0 0.0
        %729 = vmatpush1.msra.mxu0 0.0
        %730 = vmatprep.subr.mxu0 0.0
        %731 = vmatpush1.msra.mxu0 0.0
        %732 = vmatprep.subr.mxu0 0.0
        %733 = vmatpush1.msra.mxu0 0.0
        %734 = vmatprep.subr.mxu0 0.0
        %735 = vmatpush1.msra.mxu0 0.0
        %736 = vmatprep.subr.mxu0 0.0
        %737 = vmatpush1.msra.mxu0 0.0
        %738 = vmatprep.subr.mxu0 0.0
        %739 = vmatpush1.msra.mxu0 0.0
        %740 = vmatprep.subr.mxu0 0.0
        %741 = vmatpush1.msra.mxu0 0.0
        %742 = vmatprep.subr.mxu0 0.0
        %743 = vmatpush1.msra.mxu0 0.0
        %744 = vmatprep.subr.mxu0 0.0
        %745 = vmatpush1.msra.mxu0 0.0
        %746 = vmatprep.subr.mxu0 0.0
        %747 = vmatpush1.msra.mxu0 0.0
        %748 = vmatprep.subr.mxu0 0.0
        %749 = vmatpush1.msra.mxu0 0.0
        %750 = vmatprep.subr.mxu0 0.0
        %751 = vmatpush1.msra.mxu0 0.0
        %752 = vmatprep.subr.mxu0 0.0
        %753 = vmatpush1.msra.mxu0 0.0
        %754 = vmatprep.subr.mxu0 0.0
        %755 = vmatpush1.msra.mxu0 0.0
        %756 = vmatprep.subr.mxu0 0.0
        %757 = vmatpush1.msra.mxu0 0.0
        %758 = vmatprep.subr.mxu0 0.0
        %759 = vmatpush1.msra.mxu0 0.0
        %760 = vmatprep.subr.mxu0 0.0
        %761 = vmatpush1.msra.mxu0 0.0
        %762 = vmatprep.subr.mxu0 0.0
        %763 = vmatpush1.msra.mxu0 0.0
        %764 = vmatprep.subr.mxu0 0.0
        %765 = vmatpush1.msra.mxu0 0.0
        %766 = vmatprep.subr.mxu0 0.0
        %767 = vmatpush1.msra.mxu0 0.0
        %768 = vmatprep.subr.mxu0 0.0
        %769 = vmatpush1.msra.mxu0 0.0
        %770 = vmatprep.subr.mxu0 0.0
        %771 = vmatpush1.msra.mxu0 0.0
        %772 = vmatprep.subr.mxu0 0.0
        %773 = vmatpush1.msra.mxu0 0.0
        %774 = vmatprep.subr.mxu0 0.0
        %775 = vmatpush1.msra.mxu0 0.0
        %776 = vmatprep.subr.mxu0 0.0
        %777 = vmatpush1.msra.mxu0 0.0
        %778 = vmatprep.subr.mxu0 0.0
        %779 = vmatpush1.msra.mxu0 0.0
        %780 = vmatprep.subr.mxu0 0.0
        %781 = vmatpush1.msra.mxu0 0.0
        %782 = vmatprep.subr.mxu0 0.0
        %783 = vmatpush1.msra.mxu0 0.0
        %784 = vmatprep.subr.mxu0 0.0
        %785 = vmatpush1.msra.mxu0 0.0
        %786 = vmatprep.mubr.f32.mxu0 0.0
        %787 = vmatmul.mubr.f32.gmra.mrb[0].mxu0 %v720
        %v788 = vpop.f32.mrb[0].mxu0
        %v789 = vadd.f32 0.0, %v788
        %v790 = vpop.f32.mrb[0].mxu0
        %791 = vdwg.mxu0
        %792 = vrot.lane.b32.xlu0 %v291, 104
        %v793 = vpop.permute.xlu0 %792
        %794 = vrot.lane.b32.xlu0 %v291, 72
        %v795 = vpop.permute.xlu0 %794
        %v796 = vsel %vm297, %v793, 0
        %v798 = vsel %vm297, %v795, 0
        %800 = vmatprep.subr.mxu0 0.0
        %801 = vmatpush1.xpose.msra.mxu0 %v798
        %802 = vmatprep.subr.mxu0 0.0
        %803 = vmatpush1.xpose.msra.mxu0 0.0
        %804 = vmatprep.subr.mxu0 0.0
        %805 = vmatpush1.xpose.msra.mxu0 0.0
        %806 = vmatprep.subr.mxu0 0.0
        %807 = vmatpush1.xpose.msra.mxu0 0.0
        %808 = vmatprep.subr.mxu0 0.0
        %809 = vmatpush1.xpose.msra.mxu0 0.0
        %810 = vmatprep.subr.mxu0 0.0
        %811 = vmatpush1.xpose.msra.mxu0 0.0
        %812 = vmatprep.subr.mxu0 0.0
        %813 = vmatpush1.xpose.msra.mxu0 0.0
        %814 = vmatprep.subr.mxu0 0.0
        %815 = vmatpush1.xpose.msra.mxu0 0.0
        %816 = vmatprep.subr.mxu0 0.0
        %817 = vmatpush1.xpose.msra.mxu0 0.0
        %818 = vmatprep.subr.mxu0 0.0
        %819 = vmatpush1.xpose.msra.mxu0 0.0
        %820 = vmatprep.subr.mxu0 0.0
        %821 = vmatpush1.xpose.msra.mxu0 0.0
        %822 = vmatprep.subr.mxu0 0.0
        %823 = vmatpush1.xpose.msra.mxu0 0.0
        %824 = vmatprep.subr.mxu0 0.0
        %825 = vmatpush1.xpose.msra.mxu0 0.0
        %826 = vmatprep.subr.mxu0 0.0
        %827 = vmatpush1.xpose.msra.mxu0 0.0
        %828 = vmatprep.subr.mxu0 0.0
        %829 = vmatpush1.xpose.msra.mxu0 0.0
        %830 = vmatprep.subr.mxu0 0.0
        %831 = vmatpush1.xpose.msra.mxu0 0.0
        %832 = vmatprep.subr.mxu0 0.0
        %833 = vmatpush1.xpose.msra.mxu0 0.0
        %834 = vmatprep.subr.mxu0 0.0
        %835 = vmatpush1.xpose.msra.mxu0 0.0
        %836 = vmatprep.subr.mxu0 0.0
        %837 = vmatpush1.xpose.msra.mxu0 0.0
        %838 = vmatprep.subr.mxu0 0.0
        %839 = vmatpush1.xpose.msra.mxu0 0.0
        %840 = vmatprep.subr.mxu0 0.0
        %841 = vmatpush1.xpose.msra.mxu0 0.0
        %842 = vmatprep.subr.mxu0 0.0
        %843 = vmatpush1.xpose.msra.mxu0 0.0
        %844 = vmatprep.subr.mxu0 0.0
        %845 = vmatpush1.xpose.msra.mxu0 0.0
        %846 = vmatprep.subr.mxu0 0.0
        %847 = vmatpush1.xpose.msra.mxu0 0.0
        %848 = vmatprep.subr.mxu0 0.0
        %849 = vmatpush1.xpose.msra.mxu0 0.0
        %850 = vmatprep.subr.mxu0 0.0
        %851 = vmatpush1.xpose.msra.mxu0 0.0
        %852 = vmatprep.subr.mxu0 0.0
        %853 = vmatpush1.xpose.msra.mxu0 0.0
        %854 = vmatprep.subr.mxu0 0.0
        %855 = vmatpush1.xpose.msra.mxu0 0.0
        %856 = vmatprep.subr.mxu0 0.0
        %857 = vmatpush1.xpose.msra.mxu0 0.0
        %858 = vmatprep.subr.mxu0 0.0
        %859 = vmatpush1.xpose.msra.mxu0 0.0
        %860 = vmatprep.subr.mxu0 0.0
        %861 = vmatpush1.xpose.msra.mxu0 0.0
        %862 = vmatprep.subr.mxu0 0.0
        %863 = vmatpush1.xpose.msra.mxu0 0.0
        %864 = vmatprep.mubr.f32.mxu0 0.0
        %865 = vmatmul.mubr.f32.gmra.mrb[0].mxu0 %v796
        %v866 = vpop.f32.mrb[0].mxu0
        %v867 = vadd.f32 0.0, %v866
        %v868 = vpop.f32.mrb[0].mxu0
        %869 = vdwg.mxu0
        %v870 = vmul.f32 %v867, 0.35355338
        %v871 = vsel %vm297, %v870, -inf
        %872 = vmax.xlane.f32.xlu0 %v871
        %v873 = vpop.xlane.xlu0 %872
        %v874 = vsub.f32 %v870, %v873
        %v875 = vmul.f32 %v874, 1.442695
        %v876 = vpow.pop %v875
        %v877 = vsel %vm297, %v876, 0.0
        %878 = vadd.xlane.f32.xlu0 %v877
        %v879 = vpop.xlane.xlu0 %878
        %v880 = vrcp.pop %v879
        %v881 = vmul.f32 %v876, %v880
        %882 = vrot.lane.b32.xlu0 %v291, 40
        %v883 = vpop.permute.xlu0 %882
        %v886 = vsel %vm297, %v881, 0
        %888 = vmatprep.subr.mxu0 0.0
        %889 = vmatpush1.msra.mxu0 %v883
        %890 = vmatprep.subr.mxu0 0.0
        %891 = vmatpush1.msra.mxu0 0.0
        %892 = vmatprep.subr.mxu0 0.0
        %893 = vmatpush1.msra.mxu0 0.0
        %894 = vmatprep.subr.mxu0 0.0
        %895 = vmatpush1.msra.mxu0 0.0
        %896 = vmatprep.subr.mxu0 0.0
        %897 = vmatpush1.msra.mxu0 0.0
        %898 = vmatprep.subr.mxu0 0.0
        %899 = vmatpush1.msra.mxu0 0.0
        %900 = vmatprep.subr.mxu0 0.0
        %901 = vmatpush1.msra.mxu0 0.0
        %902 = vmatprep.subr.mxu0 0.0
        %903 = vmatpush1.msra.mxu0 0.0
        %904 = vmatprep.subr.mxu0 0.0
        %905 = vmatpush1.msra.mxu0 0.0
        %906 = vmatprep.subr.mxu0 0.0
        %907 = vmatpush1.msra.mxu0 0.0
        %908 = vmatprep.subr.mxu0 0.0
        %909 = vmatpush1.msra.mxu0 0.0
        %910 = vmatprep.subr.mxu0 0.0
        %911 = vmatpush1.msra.mxu0 0.0
        %912 = vmatprep.subr.mxu0 0.0
        %913 = vmatpush1.msra.mxu0 0.0
        %914 = vmatprep.subr.mxu0 0.0
        %915 = vmatpush1.msra.mxu0 0.0
        %916 = vmatprep.subr.mxu0 0.0
        %917 = vmatpush1.msra.mxu0 0.0
        %918 = vmatprep.subr.mxu0 0.0
        %919 = vmatpush1.msra.mxu0 0.0
        %920 = vmatprep.subr.mxu0 0.0
        %921 = vmatpush1.msra.mxu0 0.0
        %922 = vmatprep.subr.mxu0 0.0
        %923 = vmatpush1.msra.mxu0 0.0
        %924 = vmatprep.subr.mxu0 0.0
        %925 = vmatpush1.msra.mxu0 0.0
        %926 = vmatprep.subr.mxu0 0.0
        %927 = vmatpush1.msra.mxu0 0.0
        %928 = vmatprep.subr.mxu0 0.0
        %929 = vmatpush1.msra.mxu0 0.0
        %930 = vmatprep.subr.mxu0 0.0
        %931 = vmatpush1.msra.mxu0 0.0
        %932 = vmatprep.subr.mxu0 0.0
        %933 = vmatpush1.msra.mxu0 0.0
        %934 = vmatprep.subr.mxu0 0.0
        %935 = vmatpush1.msra.mxu0 0.0
        %936 = vmatprep.subr.mxu0 0.0
        %937 = vmatpush1.msra.mxu0 0.0
        %938 = vmatprep.subr.mxu0 0.0
        %939 = vmatpush1.msra.mxu0 0.0
        %940 = vmatprep.subr.mxu0 0.0
        %941 = vmatpush1.msra.mxu0 0.0
        %942 = vmatprep.subr.mxu0 0.0
        %943 = vmatpush1.msra.mxu0 0.0
        %944 = vmatprep.subr.mxu0 0.0
        %945 = vmatpush1.msra.mxu0 0.0
        %946 = vmatprep.subr.mxu0 0.0
        %947 = vmatpush1.msra.mxu0 0.0
        %948 = vmatprep.subr.mxu0 0.0
        %949 = vmatpush1.msra.mxu0 0.0
        %950 = vmatprep.subr.mxu0 0.0
        %951 = vmatpush1.msra.mxu0 0.0
        %952 = vmatprep.mubr.f32.mxu0 0.0
        %953 = vmatmul.mubr.f32.gmra.mrb[0].mxu0 %v886
        %v954 = vpop.f32.mrb[0].mxu0
        %v955 = vadd.f32 0.0, %v954
        %v956 = vpop.f32.mrb[0].mxu0
        %957 = vdwg.mxu0
        %959 = vrot.lane.b32.xlu0 %v623, 8
        %v960 = vpop.permute.xlu0 %959
        %963 = vrot.lane.b32.xlu0 %v789, 16
        %v964 = vpop.permute.xlu0 %963
        %967 = vrot.lane.b32.xlu0 %v955, 24
        %v968 = vpop.permute.xlu0 %967
        %v970 = vsel %vm297, %v457, %v960
        %vm971 = vcmask 130048
        %v972 = vsel %vm971, %v970, %v964
        %vm973 = vcmask 195584
        %v974 = vsel %vm973, %v972, %v968
        %v975 = vld [vmem:[#allocation7] sm:$0xff]
        %v976 = vld [vmem:[#allocation7 + $0x8] sm:$0xff]
        %v977 = vld [vmem:[#allocation7 + $0x10] sm:$0xff]
        %v978 = vld [vmem:[#allocation7 + $0x18] sm:$0xff]
        %v980 = vsel %vm220, %v974, 0
        %982 = vmatprep.subr.mxu0 0.0
        %983 = vmatpush1.msra.mxu0 %v975
        %984 = vmatprep.subr.mxu0 0.0
        %985 = vmatpush1.msra.mxu0 %v976
        %986 = vmatprep.subr.mxu0 0.0
        %987 = vmatpush1.msra.mxu0 %v977
        %988 = vmatprep.subr.mxu0 0.0
        %989 = vmatpush1.msra.mxu0 %v978
        %990 = vmatprep.subr.mxu0 0.0
        %991 = vmatpush1.msra.mxu0 0.0
        %992 = vmatprep.subr.mxu0 0.0
        %993 = vmatpush1.msra.mxu0 0.0
        %994 = vmatprep.subr.mxu0 0.0
        %995 = vmatpush1.msra.mxu0 0.0
        %996 = vmatprep.subr.mxu0 0.0
        %997 = vmatpush1.msra.mxu0 0.0
        %998 = vmatprep.subr.mxu0 0.0
        %999 = vmatpush1.msra.mxu0 0.0
        %1000 = vmatprep.subr.mxu0 0.0
        %1001 = vmatpush1.msra.mxu0 0.0
        %1002 = vmatprep.subr.mxu0 0.0
        %1003 = vmatpush1.msra.mxu0 0.0
        %1004 = vmatprep.subr.mxu0 0.0
        %1005 = vmatpush1.msra.mxu0 0.0
        %1006 = vmatprep.subr.mxu0 0.0
        %1007 = vmatpush1.msra.mxu0 0.0
        %1008 = vmatprep.subr.mxu0 0.0
        %1009 = vmatpush1.msra.mxu0 0.0
        %1010 = vmatprep.subr.mxu0 0.0
        %1011 = vmatpush1.msra.mxu0 0.0
        %1012 = vmatprep.subr.mxu0 0.0
        %1013 = vmatpush1.msra.mxu0 0.0
        %1014 = vmatprep.subr.mxu0 0.0
        %1015 = vmatpush1.msra.mxu0 0.0
        %1016 = vmatprep.subr.mxu0 0.0
        %1017 = vmatpush1.msra.mxu0 0.0
        %1018 = vmatprep.subr.mxu0 0.0
        %1019 = vmatpush1.msra.mxu0 0.0
        %1020 = vmatprep.subr.mxu0 0.0
        %1021 = vmatpush1.msra.mxu0 0.0
        %1022 = vmatprep.subr.mxu0 0.0
        %1023 = vmatpush1.msra.mxu0 0.0
        %1024 = vmatprep.subr.mxu0 0.0
        %1025 = vmatpush1.msra.mxu0 0.0
        %1026 = vmatprep.subr.mxu0 0.0
        %1027 = vmatpush1.msra.mxu0 0.0
        %1028 = vmatprep.subr.mxu0 0.0
        %1029 = vmatpush1.msra.mxu0 0.0
        %1030 = vmatprep.subr.mxu0 0.0
        %1031 = vmatpush1.msra.mxu0 0.0
        %1032 = vmatprep.subr.mxu0 0.0
        %1033 = vmatpush1.msra.mxu0 0.0
        %1034 = vmatprep.subr.mxu0 0.0
        %1035 = vmatpush1.msra.mxu0 0.0
        %1036 = vmatprep.subr.mxu0 0.0
        %1037 = vmatpush1.msra.mxu0 0.0
        %1038 = vmatprep.subr.mxu0 0.0
        %1039 = vmatpush1.msra.mxu0 0.0
        %1040 = vmatprep.subr.mxu0 0.0
        %1041 = vmatpush1.msra.mxu0 0.0
        %1042 = vmatprep.subr.mxu0 0.0
        %1043 = vmatpush1.msra.mxu0 0.0
        %1044 = vmatprep.subr.mxu0 0.0
        %1045 = vmatpush1.msra.mxu0 0.0
        %1046 = vmatprep.mubr.f32.mxu0 0.0
        %1047 = vmatmul.mubr.f32.gmra.mrb[0].mxu0 %v980
        %v1048 = vpop.f32.mrb[0].mxu0
        %v1049 = vadd.f32 %v215, %v1048
        %v1050 = vpop.f32.mrb[0].mxu0
        %1051 = vdwg.mxu0
        %v1052 = vsel %vm220, %v1049, 0.0
        %1053 = vadd.xlane.f32.xlu0 %v1052
        %v1054 = vpop.xlane.xlu0 %1053
        %v1055 = vrcp.pop 32.0
        %v1056 = vmul.f32 %v1054, %v1055
        %v1057 = vrot.slane %v1056, 4
        %v1058 = vadd.f32 %v1056, %v1057
        %v1059 = vrot.slane %v1058, 2
        %v1060 = vadd.f32 %v1058, %v1059
        %v1061 = vrot.slane %v1060, 1
        %v1062 = vadd.f32 %v1060, %v1061
        %v1063 = vrcp.pop 8.0
        %v1064 = vmul.f32 %v1062, %v1063
        %v1065 = vsub.f32 %v1049, %v1064
        %v1066 = vmul.f32 %v1065, %v1065
        %v1067 = vsel %vm220, %v1066, 0.0
        %1068 = vadd.xlane.f32.xlu0 %v1067
        %v1069 = vpop.xlane.xlu0 %1068
        %v1070 = vrot.slane %v1069, 4
        %v1071 = vadd.f32 %v1069, %v1070
        %v1072 = vrot.slane %v1071, 2
        %v1073 = vadd.f32 %v1071, %v1072
        %v1074 = vrot.slane %v1073, 1
        %v1075 = vadd.f32 %v1073, %v1074
        %v1076 = vrcp.pop 255.0
        %v1077 = vmul.f32 %v1075, %v1076
        %v1078 = vadd.f32 %v1077, 1e-05
        %v1079 = vrsqrt.pop %v1078
        %v1080 = vmul.f32 %v1065, %v1079
        %1081 = vst.msk [vmem:[%s214] sm:$0xff] %vm220, %v1080
        %s1082 = sand.u32 %s97, 1
        %s1083 = scalar_lea.sflag [#allocation4], %s1082
        %s1084 = sand.u32 %s97, 1
        %s1085 = smul.addr %s1084, 8
        %s1086 = scalar_lea.vmem [#allocation8], %s1085
        // Predicated region
        $region45: #{tpu_custom_call.1} parent=31 // pred_check
          %p1087 = pneg %p107
        $region46: #{tpu_custom_call.1} parent=31 // pred_check_branch
          %1089 = sbr.rel (%p1087) target = $region48
        $region47: #{tpu_custom_call.1} parent=31 // pred_region
          %s1091 = ssub.s32 128, 128
          %1092 = vsyncadd %s1083, %s1091
          %s1093 = smul.addr %s21, 128
          %s1094 = scalar_lea.hbm %s3, %s1093
          %s1096 = sshll.u32 %s1086, 4
          %s1097 = int_to_ptr.vmem [resolvable:$true] %s1096
          %1099 = dma.vmem_to_hbm [thread:$0]  %s1097, 128, %s1094, %s1083
        $region48: #{tpu_custom_call.1} parent=31 // pred_fallthru
          _
      $region32: #{tpu_custom_call.1} parent=5 // pred_fallthru
        _
      %p1100 = scmp.le.s32.totalorder 2, %s16
      // Predicated region
      $region49: #{tpu_custom_call.1} parent=5 // pred_check
        %p1101 = pneg %p1100
      $region50: #{tpu_custom_call.1} parent=5 // pred_check_branch
        %1103 = sbr.rel (%p1101) target = $region52
      $region51: #{tpu_custom_call.1} parent=5 // pred_region
        %s1104 = ssub.s32 %s16, 2
        // Predicated region
        $region53: #{tpu_custom_call.1} parent=51 // pred_check
          %p1105 = pneg %p113
        $region54: #{tpu_custom_call.1} parent=51 // pred_check_branch
          %1107 = sbr.rel (%p1105) target = $region56
        $region55: #{tpu_custom_call.1} parent=51 // pred_region
          %s1108 = sand.u32 %s98, 1
          %s1109 = scalar_lea.sflag [#allocation4], %s1108
          %s1110 = sand.u32 %s98, 1
          %s1111 = smul.addr %s1110, 8
          %s1112 = scalar_lea.vmem [#allocation8], %s1111
          %1113 = dma.done %s1109, 128
        $region56: #{tpu_custom_call.1} parent=51 // pred_fallthru
          _
      $region52: #{tpu_custom_call.1} parent=5 // pred_fallthru
        _
    $region6: #{tpu_custom_call.1} parent=1 // loop_footer
      %s20 = sadd.s32 1, %s16
    $region7: #{tpu_custom_call.1} parent=1 // loop_footer_branch
      %15 = sbr.rel target = $region3
    $region8: #{tpu_custom_call.1} parent=1 // loop_exit
      _
    %1114 = vsyncpa [#allocation3], 1
    %s1115 = scalar_lea.sflag [#allocation3], 1
    %1116 = vsyncpa %s1115, 1
    %1117 = vsyncpa [#allocation6], 1
    %1118 = vsyncpa [#allocation4], 1
    %s1119 = scalar_lea.sflag [#allocation4], 1
    %1120 = vsyncpa %s1119, 1

</llo_original>
